<compile_context>
chip_gen: v5e
topology: v5e:2x2
jax: 0.10.0
libtpu: 0.0.40
codegen_flags: <defaults>
</compile_context>

<pallas_src>
import functools

import numpy as np
import jax
import jax.numpy as jnp
from jax import lax
from jax.experimental import pallas as pl
from jax.experimental.pallas import tpu as pltpu


def fm_kernel(x_ref, tab_ref, bias_ref, out_ref, *, emd_dims, num_fields):
    # x_ref:    (TB, F)  int32   already-offset indices (disjoint per-field ranges)
    # tab_ref:  (V, Wp)  float32 fused table [emb | emb*emb | lin | 0-pad], Wp % 128 == 0
    # bias_ref: (1, 1)   float32 CategoryLinear bias (SMEM)
    # out_ref:  (1, TB)  float32 sigmoid(linear + cross), lane-dense store
    x = x_ref[...]                                  # (TB, F)
    tb = x.shape[0]
    v = tab_ref.shape[0]

    # Multi-hot (TB, V), built directly in 2D (no (TB, F, V) intermediate,
    # no reshape).  Entries are exactly 0/1 because field ranges are disjoint.
    lane = lax.broadcasted_iota(jnp.int32, (tb, v), 1)
    multihot = jnp.zeros((tb, v), jnp.float32)
    for f in range(num_fields):                     # static unroll, F is small
        multihot = multihot + (lane == x[:, f:f + 1]).astype(jnp.float32)

    # Single MXU pass: (TB, V) @ (V, Wp).
    fused = jnp.dot(multihot, tab_ref[...], preferred_element_type=jnp.float32)

    sum_f = fused[:, :emd_dims]                     # sum over fields of emb     (TB, D)
    sum_sq = fused[:, emd_dims:2 * emd_dims]        # sum over fields of emb^2   (TB, D)
    lin = fused[:, 2 * emd_dims]                    # sum over fields of lin wts (TB,)

    # FM cross term: 0.5 * sum_d[(sum_f e)^2 - sum_f e^2]
    cross = 0.5 * jnp.sum(sum_f * sum_f - sum_sq, axis=1)          # (TB,)
    logit = lin + bias_ref[0, 0] + cross                           # (TB,)
    out_ref[0, :] = jax.nn.sigmoid(logit)                          # lane-dense


def fm_forward(x_idx, emb_table, lin_table, bias, init_index, *, tb=128):
    """x_idx: (B, F) int32 per-field indices (not yet offset)."""
    B, F = x_idx.shape
    V, D = emb_table.shape

    # Index offsetting (PyTorch does this in forward too) — plain-JAX glue.
    x_off = (x_idx + init_index[None, :]).astype(jnp.int32)

    # Fused RHS table: [emb | emb*emb | lin], padded to a multiple of 128 lanes.
    W = 2 * D + 1
    Wp = ((W + 127) // 128) * 128
    fused_tab = jnp.concatenate([emb_table, emb_table * emb_table, lin_table],
                                axis=1)
    fused_tab = jnp.pad(fused_tab, ((0, 0), (0, Wp - W)))

    # Pad batch to a multiple of the tile (index-0 pad rows are valid, discarded).
    Bp = ((B + tb - 1) // tb) * tb
    if Bp != B:
        x_off = jnp.pad(x_off, ((0, Bp - B), (0, 0)))
    num_tiles = Bp // tb

    # VMEM budget — relevant on v7x (64 MiB physical, 32 MiB scoped default).
    est = (2 * (tb * F * 4 + tb * 4)          # double-buffered x / out blocks
           + 2 * V * Wp * 4                   # resident fused table (+ buffer)
           + tb * V * 4 + tb * Wp * 4         # multi-hot + matmul result
           + (4 << 20))                       # headroom
    vmem_limit = int(max(16 << 20, min(est, 64 << 20)))

    out = pl.pallas_call(
        functools.partial(fm_kernel, emd_dims=D, num_fields=F),
        out_shape=jax.ShapeDtypeStruct((1, Bp), jnp.float32),
        grid=(num_tiles,),
        in_specs=[
            pl.BlockSpec((tb, F), lambda i: (i, 0)),                 # x tile
            pl.BlockSpec((V, Wp), lambda i: (0, 0)),                 # resident table
            pl.BlockSpec((1, 1), lambda i: (0, 0),
                         memory_space=pltpu.MemorySpace.SMEM),       # bias scalar
        ],
        out_specs=pl.BlockSpec((1, tb), lambda i: (0, i)),           # lane-dense
        compiler_params=pltpu.CompilerParams(
            dimension_semantics=("parallel",),
            vmem_limit_bytes=vmem_limit),
    )(x_off, fused_tab, bias)

    return out.reshape(Bp, 1)[:B]


def reference_forward(x_idx, emb_table, lin_table, bias, init_index):
    x_off = x_idx + init_index[None, :]
    emds = emb_table[x_off]                                          # (B, F, D)
    square_of_sum = jnp.sum(emds, axis=1) ** 2
    sum_of_square = jnp.sum(emds ** 2, axis=1)
    cross = 0.5 * jnp.sum(square_of_sum - sum_of_square, axis=1, keepdims=True)
    lin = jnp.sum(lin_table[x_off], axis=1) + bias                   # (B, 1)
    return jax.nn.sigmoid(lin + cross)


if __name__ == "__main__":
    field_nums = (3, 4, 5, 6)          # 4 categorical fields
    emd_dims = 32
    batch = 2

    V = int(sum(field_nums))
    F = len(field_nums)
    init_index = jnp.asarray(
        np.array((0, *np.cumsum(field_nums)[:-1]), dtype=np.int32))

    key = jax.random.PRNGKey(0)
    k_emb, k_lin, k_x = jax.random.split(key, 3)

    # FMCross.embeddings: xavier_uniform((V, emd_dims))
    limit = float(np.sqrt(6.0 / (V + emd_dims)))
    emb_table = jax.random.uniform(
        k_emb, (V, emd_dims), jnp.float32, minval=-limit, maxval=limit)

    # CategoryLinear: nn.Embedding(V, 1) (default N(0,1) init) + zero bias
    lin_table = jax.random.normal(k_lin, (V, 1), jnp.float32)
    bias = jnp.zeros((1, 1), jnp.float32)

    # Random per-field category indices, each within its field's cardinality.
    maxes = jnp.asarray(field_nums, dtype=jnp.int32)
    u = jax.random.uniform(k_x, (batch, F))
    x_idx = jnp.minimum((u * maxes[None, :]).astype(jnp.int32), maxes - 1)

    out = fm_forward(x_idx, emb_table, lin_table, bias, init_index)
    out = jax.block_until_ready(out)

    ref = reference_forward(x_idx, emb_table, lin_table, bias, init_index)
    assert out.shape == (batch, 1)
    assert np.allclose(np.asarray(out), np.asarray(ref), atol=1e-5, rtol=1e-5)

    print("KERNEL_OK")
</pallas_src>

<mosaic_0001>
module attributes {stable_mosaic.version = 11 : i64} {
  func.func @fm_kernel(%arg0: i32, %arg1: memref<128x4xi32, #tpu.memory_space<vmem>>, %arg2: memref<18x128xf32, #tpu.memory_space<vmem>>, %arg3: memref<1x1xf32, #tpu.memory_space<smem>>, %arg4: memref<1x128xf32, #tpu.memory_space<vmem>>) attributes {dimension_semantics = [#tpu.dimension_semantics<parallel>], iteration_bounds = array<i64: 1>, scalar_prefetch = 0 : i64, scratch_operands = 0 : i64, tpu.core_type = #tpu.core_type<tc>, window_params = [{transform_indices = @transform_0, window_bounds = array<i64: 128, 4>}, {pipeline_mode = #tpu.pipeline_mode<synchronous>, transform_indices = @transform_1, window_bounds = array<i64: 18, 128>}, {transform_indices = @transform_2, window_bounds = array<i64: 1, 1>}, {transform_indices = @transform_3, window_bounds = array<i64: 1, 128>}]} {
    %c0 = arith.constant 0 : index
    %c0_0 = arith.constant 0 : index
    %0 = vector.load %arg1[%c0, %c0_0] : memref<128x4xi32, #tpu.memory_space<vmem>>, vector<128x4xi32>
    %1 = tpu.iota {dimensions = array<i32: 1>} : vector<128x18xi32>
    %cst = arith.constant 0.000000e+00 : f32
    %2 = vector.broadcast %cst : f32 to vector<128x18xf32>
    %3 = vector.extract_strided_slice %0 {offsets = [0, 0], sizes = [128, 1], strides = [1, 1]} : vector<128x4xi32> to vector<128x1xi32>
    %4 = vector.broadcast %3 : vector<128x1xi32> to vector<128x18xi32>
    %5 = arith.cmpi eq, %1, %4 : vector<128x18xi32>
    %6 = arith.extui %5 : vector<128x18xi1> to vector<128x18xi32>
    %7 = arith.sitofp %6 : vector<128x18xi32> to vector<128x18xf32>
    %8 = arith.addf %2, %7 : vector<128x18xf32>
    %9 = vector.extract_strided_slice %0 {offsets = [0, 1], sizes = [128, 1], strides = [1, 1]} : vector<128x4xi32> to vector<128x1xi32>
    %10 = vector.broadcast %9 : vector<128x1xi32> to vector<128x18xi32>
    %11 = arith.cmpi eq, %1, %10 : vector<128x18xi32>
    %12 = arith.extui %11 : vector<128x18xi1> to vector<128x18xi32>
    %13 = arith.sitofp %12 : vector<128x18xi32> to vector<128x18xf32>
    %14 = arith.addf %8, %13 : vector<128x18xf32>
    %15 = vector.extract_strided_slice %0 {offsets = [0, 2], sizes = [128, 1], strides = [1, 1]} : vector<128x4xi32> to vector<128x1xi32>
    %16 = vector.broadcast %15 : vector<128x1xi32> to vector<128x18xi32>
    %17 = arith.cmpi eq, %1, %16 : vector<128x18xi32>
    %18 = arith.extui %17 : vector<128x18xi1> to vector<128x18xi32>
    %19 = arith.sitofp %18 : vector<128x18xi32> to vector<128x18xf32>
    %20 = arith.addf %14, %19 : vector<128x18xf32>
    %21 = vector.extract_strided_slice %0 {offsets = [0, 3], sizes = [128, 1], strides = [1, 1]} : vector<128x4xi32> to vector<128x1xi32>
    %22 = vector.broadcast %21 : vector<128x1xi32> to vector<128x18xi32>
    %23 = arith.cmpi eq, %1, %22 : vector<128x18xi32>
    %24 = arith.extui %23 : vector<128x18xi1> to vector<128x18xi32>
    %25 = arith.sitofp %24 : vector<128x18xi32> to vector<128x18xf32>
    %26 = arith.addf %20, %25 : vector<128x18xf32>
    %c0_1 = arith.constant 0 : index
    %c0_2 = arith.constant 0 : index
    %27 = vector.load %arg2[%c0_1, %c0_2] : memref<18x128xf32, #tpu.memory_space<vmem>>, vector<18x128xf32>
    %cst_3 = arith.constant dense<0.000000e+00> : vector<128x128xf32>
    %28 = tpu.matmul %26, %27, %cst_3 {dimension_numbers = #tpu.dot_dimension_numbers<[1], [0], [0], [1], [0, 0, 1, 1], [], []>} : vector<128x18xf32>, vector<18x128xf32>, vector<128x128xf32> -> vector<128x128xf32>
    %29 = vector.extract_strided_slice %28 {offsets = [0, 0], sizes = [128, 32], strides = [1, 1]} : vector<128x128xf32> to vector<128x32xf32>
    %30 = vector.extract_strided_slice %28 {offsets = [0, 32], sizes = [128, 32], strides = [1, 1]} : vector<128x128xf32> to vector<128x32xf32>
    %31 = vector.extract_strided_slice %28 {offsets = [0, 64], sizes = [128, 1], strides = [1, 1]} : vector<128x128xf32> to vector<128x1xf32>
    %32 = vector.shape_cast %31 : vector<128x1xf32> to vector<128xf32>
    %33 = arith.mulf %29, %29 : vector<128x32xf32>
    %34 = arith.subf %33, %30 : vector<128x32xf32>
    %cst_4 = arith.constant dense<0.000000e+00> : vector<128xf32>
    %35 = vector.multi_reduction <add>, %34, %cst_4 [1] : vector<128x32xf32> to vector<128xf32>
    %cst_5 = arith.constant 5.000000e-01 : f32
    %36 = vector.broadcast %cst_5 : f32 to vector<128xf32>
    %37 = arith.mulf %36, %35 : vector<128xf32>
    %c0_6 = arith.constant 0 : index
    %c0_7 = arith.constant 0 : index
    %38 = memref.load %arg3[%c0_6, %c0_7] : memref<1x1xf32, #tpu.memory_space<smem>>
    %39 = vector.broadcast %38 : f32 to vector<128xf32>
    %40 = arith.addf %32, %39 : vector<128xf32>
    %41 = arith.addf %40, %37 : vector<128xf32>
    %42 = arith.negf %41 : vector<128xf32>
    %43 = math.exp %42 : vector<128xf32>
    %cst_8 = arith.constant 1.000000e+00 : f32
    %44 = vector.broadcast %cst_8 : f32 to vector<128xf32>
    %45 = arith.addf %44, %43 : vector<128xf32>
    %46 = arith.divf %44, %45 : vector<128xf32>
    %c0_9 = arith.constant 0 : index
    %c0_10 = arith.constant 0 : index
    %47 = vector.load %arg4[%c0_9, %c0_10] : memref<1x128xf32, #tpu.memory_space<vmem>>, vector<1x128xf32>
    %48 = vector.shape_cast %47 : vector<1x128xf32> to vector<128xf32>
    %49 = vector.shape_cast %46 : vector<128xf32> to vector<1x128xf32>
    tpu.vector_store %arg4[%c0_9, %c0_10], %49 {strides = array<i32>} : memref<1x128xf32, #tpu.memory_space<vmem>>, vector<1x128xf32>,
    return
  }
  func.func @transform_0(%arg0: i32) -> (i32, i32) {
    %c0_i32 = arith.constant 0 : i32
    %c0_i32_0 = arith.constant 0 : i32
    return %arg0, %c0_i32 : i32, i32
  }
  func.func @transform_1(%arg0: i32) -> (i32, i32) {
    %c0_i32 = arith.constant 0 : i32
    %c0_i32_0 = arith.constant 0 : i32
    %c0_i32_1 = arith.constant 0 : i32
    return %c0_i32, %c0_i32_0 : i32, i32
  }
  func.func @transform_2(%arg0: i32) -> (i32, i32) {
    %c0_i32 = arith.constant 0 : i32
    %c0_i32_0 = arith.constant 0 : i32
    %c0_i32_1 = arith.constant 0 : i32
    return %c0_i32, %c0_i32_0 : i32, i32
  }
  func.func @transform_3(%arg0: i32) -> (i32, i32) {
    %c0_i32 = arith.constant 0 : i32
    %c0_i32_0 = arith.constant 0 : i32
    return %c0_i32, %arg0 : i32, i32
  }
}

</mosaic_0001>

<llo_original>
// kernel: tpu_custom_call.1
$region0: #{tpu_custom_call.1}
  #allocation0 [shape = 'u32[]', space=smem, size = 0x4, offset = 0x4, fixed_abs, tag = 'smem constant byte address 0x4 - core index']
  #allocation1 [shape = 'u32[72,128]{1,0:T(1,128)}', space=vmem, size = 0x9000, scoped, tag = 'internal scratch']
  #allocation2 [shape = 'f32[1,1]{1,0:T(1,128)S(6)}', space=smem, size = 0x200, scoped, tag = 'scoped memory for tpu_custom_call.1']
  %s0 = inlined_call_operand.vmem [shape: s32[128,4], index: 0, kind: input, shape index: {}]
  %s1 = inlined_call_operand.vmem [shape: f32[18,128], index: 1, kind: input, shape index: {}]
  %s2 = inlined_call_operand.<no memory space> [shape: f32[1,1], index: 2, kind: input, shape index: {}]
  %s3 = inlined_call_operand.hbm [shape: f32[1,128], index: 3, kind: output, shape index: {}]
  %s4 = sld [smem:[#allocation0]]
  $region22: #{tpu_custom_call.1} parent=0
    _
  %s6 = ssub.s32 1, %s4
  %s7 = scalar_select 0, %s6, %s4
  %8 = sst [smem:[#allocation2]] %s2
  $region1: #{tpu_custom_call.1} parent=0
    #allocation3 [shape = 'u8[512]{0}', space=vmem, size = 0x400, scoped, tag = 'output window, operand 0, single buffered']
    #allocation4 [shape = 's32[1]{0}', space=sflag, size = 0x4, scoped, tag = 'scoped memory for tpu_custom_call.1']
    %9 = vsyncpa [#allocation4], 0
    // Predicated region
    $region2: #{tpu_custom_call.1} parent=1 // pred_check
      _
    $region3: #{tpu_custom_call.1} parent=1 // pred_check_branch
      %11 = sbr.rel (0) target = $region5
    $region4: #{tpu_custom_call.1} parent=1 // pred_region
      _
    $region5: #{tpu_custom_call.1} parent=1 // pred_fallthru
      _
    // Predicated region
    $region6: #{tpu_custom_call.1} parent=1 // pred_check
      _
    $region7: #{tpu_custom_call.1} parent=1 // pred_check_branch
      %13 = sbr.rel (0) target = $region9
    $region8: #{tpu_custom_call.1} parent=1 // pred_region
      _
    $region9: #{tpu_custom_call.1} parent=1 // pred_fallthru
      _
    // Predicated region
    $region10: #{tpu_custom_call.1} parent=1 // pred_check
      _
    $region11: #{tpu_custom_call.1} parent=1 // pred_check_branch
      %15 = sbr.rel (0) target = $region13
    $region12: #{tpu_custom_call.1} parent=1 // pred_region
      _
    $region13: #{tpu_custom_call.1} parent=1 // pred_fallthru
      _
    %v16 = vld [vmem:[%s0] sm:$0xff]
    %v17 = vld [vmem:[%s0 + $0x8] sm:$0xff]
    %v18 = vld [vmem:[%s0 + $0x10] sm:$0xff]
    %v19 = vld [vmem:[%s0 + $0x18] sm:$0xff]
    %v20 = vld [vmem:[%s0 + $0x20] sm:$0xff]
    %v21 = vld [vmem:[%s0 + $0x28] sm:$0xff]
    %v22 = vld [vmem:[%s0 + $0x30] sm:$0xff]
    %v23 = vld [vmem:[%s0 + $0x38] sm:$0xff]
    %v24 = vld [vmem:[%s0 + $0x40] sm:$0xff]
    %v25 = vld [vmem:[%s0 + $0x48] sm:$0xff]
    %v26 = vld [vmem:[%s0 + $0x50] sm:$0xff]
    %v27 = vld [vmem:[%s0 + $0x58] sm:$0xff]
    %v28 = vld [vmem:[%s0 + $0x60] sm:$0xff]
    %v29 = vld [vmem:[%s0 + $0x68] sm:$0xff]
    %v30 = vld [vmem:[%s0 + $0x70] sm:$0xff]
    %v31 = vld [vmem:[%s0 + $0x78] sm:$0xff]
    %v32 = vlaneseq
    %v33 = vand.u32 %v32, 127
    %34 = vset.pattern.permute.xlu0 0
    %35 = vperm.xlu0 %34, %v16
    %v36 = vpop.permute.xlu0 %35
    %37 = vset.pattern.permute.xlu0 0
    %38 = vperm.xlu0 %37, %v17
    %v39 = vpop.permute.xlu0 %38
    %40 = vset.pattern.permute.xlu0 0
    %41 = vperm.xlu0 %40, %v18
    %v42 = vpop.permute.xlu0 %41
    %43 = vset.pattern.permute.xlu0 0
    %44 = vperm.xlu0 %43, %v19
    %v45 = vpop.permute.xlu0 %44
    %46 = vset.pattern.permute.xlu0 0
    %47 = vperm.xlu0 %46, %v20
    %v48 = vpop.permute.xlu0 %47
    %49 = vset.pattern.permute.xlu0 0
    %50 = vperm.xlu0 %49, %v21
    %v51 = vpop.permute.xlu0 %50
    %52 = vset.pattern.permute.xlu0 0
    %53 = vperm.xlu0 %52, %v22
    %v54 = vpop.permute.xlu0 %53
    %55 = vset.pattern.permute.xlu0 0
    %56 = vperm.xlu0 %55, %v23
    %v57 = vpop.permute.xlu0 %56
    %58 = vset.pattern.permute.xlu0 0
    %59 = vperm.xlu0 %58, %v24
    %v60 = vpop.permute.xlu0 %59
    %61 = vset.pattern.permute.xlu0 0
    %62 = vperm.xlu0 %61, %v25
    %v63 = vpop.permute.xlu0 %62
    %64 = vset.pattern.permute.xlu0 0
    %65 = vperm.xlu0 %64, %v26
    %v66 = vpop.permute.xlu0 %65
    %67 = vset.pattern.permute.xlu0 0
    %68 = vperm.xlu0 %67, %v27
    %v69 = vpop.permute.xlu0 %68
    %70 = vset.pattern.permute.xlu0 0
    %71 = vperm.xlu0 %70, %v28
    %v72 = vpop.permute.xlu0 %71
    %73 = vset.pattern.permute.xlu0 0
    %74 = vperm.xlu0 %73, %v29
    %v75 = vpop.permute.xlu0 %74
    %76 = vset.pattern.permute.xlu0 0
    %77 = vperm.xlu0 %76, %v30
    %v78 = vpop.permute.xlu0 %77
    %79 = vset.pattern.permute.xlu0 0
    %80 = vperm.xlu0 %79, %v31
    %v81 = vpop.permute.xlu0 %80
    %vm82 = vcmp.eq.s32.totalorder %v33, %v36
    %vm83 = vcmp.eq.s32.totalorder %v33, %v39
    %vm84 = vcmp.eq.s32.totalorder %v33, %v42
    %vm85 = vcmp.eq.s32.totalorder %v33, %v45
    %vm86 = vcmp.eq.s32.totalorder %v33, %v48
    %vm87 = vcmp.eq.s32.totalorder %v33, %v51
    %vm88 = vcmp.eq.s32.totalorder %v33, %v54
    %vm89 = vcmp.eq.s32.totalorder %v33, %v57
    %vm90 = vcmp.eq.s32.totalorder %v33, %v60
    %vm91 = vcmp.eq.s32.totalorder %v33, %v63
    %vm92 = vcmp.eq.s32.totalorder %v33, %v66
    %vm93 = vcmp.eq.s32.totalorder %v33, %v69
    %vm94 = vcmp.eq.s32.totalorder %v33, %v72
    %vm95 = vcmp.eq.s32.totalorder %v33, %v75
    %vm96 = vcmp.eq.s32.totalorder %v33, %v78
    %vm97 = vcmp.eq.s32.totalorder %v33, %v81
    %v98 = vsel %vm82, 1, 0
    %v99 = vsel %vm83, 1, 0
    %v100 = vsel %vm84, 1, 0
    %v101 = vsel %vm85, 1, 0
    %v102 = vsel %vm86, 1, 0
    %v103 = vsel %vm87, 1, 0
    %v104 = vsel %vm88, 1, 0
    %v105 = vsel %vm89, 1, 0
    %v106 = vsel %vm90, 1, 0
    %v107 = vsel %vm91, 1, 0
    %v108 = vsel %vm92, 1, 0
    %v109 = vsel %vm93, 1, 0
    %v110 = vsel %vm94, 1, 0
    %v111 = vsel %vm95, 1, 0
    %v112 = vsel %vm96, 1, 0
    %v113 = vsel %vm97, 1, 0
    %v114 = vcvt.s32.f32 %v98
    %v115 = vcvt.s32.f32 %v99
    %v116 = vcvt.s32.f32 %v100
    %v117 = vcvt.s32.f32 %v101
    %v118 = vcvt.s32.f32 %v102
    %v119 = vcvt.s32.f32 %v103
    %v120 = vcvt.s32.f32 %v104
    %v121 = vcvt.s32.f32 %v105
    %v122 = vcvt.s32.f32 %v106
    %v123 = vcvt.s32.f32 %v107
    %v124 = vcvt.s32.f32 %v108
    %v125 = vcvt.s32.f32 %v109
    %v126 = vcvt.s32.f32 %v110
    %v127 = vcvt.s32.f32 %v111
    %v128 = vcvt.s32.f32 %v112
    %v129 = vcvt.s32.f32 %v113
    %v130 = vadd.f32 %v114, 0.0
    %v131 = vadd.f32 %v115, 0.0
    %v132 = vadd.f32 %v116, 0.0
    %v133 = vadd.f32 %v117, 0.0
    %v134 = vadd.f32 %v118, 0.0
    %v135 = vadd.f32 %v119, 0.0
    %v136 = vadd.f32 %v120, 0.0
    %v137 = vadd.f32 %v121, 0.0
    %v138 = vadd.f32 %v122, 0.0
    %v139 = vadd.f32 %v123, 0.0
    %v140 = vadd.f32 %v124, 0.0
    %v141 = vadd.f32 %v125, 0.0
    %v142 = vadd.f32 %v126, 0.0
    %v143 = vadd.f32 %v127, 0.0
    %v144 = vadd.f32 %v128, 0.0
    %v145 = vadd.f32 %v129, 0.0
    %146 = vset.pattern.permute.xlu0 1
    %147 = vperm.xlu0 %146, %v16
    %v148 = vpop.permute.xlu0 %147
    %149 = vset.pattern.permute.xlu0 1
    %150 = vperm.xlu0 %149, %v17
    %v151 = vpop.permute.xlu0 %150
    %152 = vset.pattern.permute.xlu0 1
    %153 = vperm.xlu0 %152, %v18
    %v154 = vpop.permute.xlu0 %153
    %155 = vset.pattern.permute.xlu0 1
    %156 = vperm.xlu0 %155, %v19
    %v157 = vpop.permute.xlu0 %156
    %158 = vset.pattern.permute.xlu0 1
    %159 = vperm.xlu0 %158, %v20
    %v160 = vpop.permute.xlu0 %159
    %161 = vset.pattern.permute.xlu0 1
    %162 = vperm.xlu0 %161, %v21
    %v163 = vpop.permute.xlu0 %162
    %164 = vset.pattern.permute.xlu0 1
    %165 = vperm.xlu0 %164, %v22
    %v166 = vpop.permute.xlu0 %165
    %167 = vset.pattern.permute.xlu0 1
    %168 = vperm.xlu0 %167, %v23
    %v169 = vpop.permute.xlu0 %168
    %170 = vset.pattern.permute.xlu0 1
    %171 = vperm.xlu0 %170, %v24
    %v172 = vpop.permute.xlu0 %171
    %173 = vset.pattern.permute.xlu0 1
    %174 = vperm.xlu0 %173, %v25
    %v175 = vpop.permute.xlu0 %174
    %176 = vset.pattern.permute.xlu0 1
    %177 = vperm.xlu0 %176, %v26
    %v178 = vpop.permute.xlu0 %177
    %179 = vset.pattern.permute.xlu0 1
    %180 = vperm.xlu0 %179, %v27
    %v181 = vpop.permute.xlu0 %180
    %182 = vset.pattern.permute.xlu0 1
    %183 = vperm.xlu0 %182, %v28
    %v184 = vpop.permute.xlu0 %183
    %185 = vset.pattern.permute.xlu0 1
    %186 = vperm.xlu0 %185, %v29
    %v187 = vpop.permute.xlu0 %186
    %188 = vset.pattern.permute.xlu0 1
    %189 = vperm.xlu0 %188, %v30
    %v190 = vpop.permute.xlu0 %189
    %191 = vset.pattern.permute.xlu0 1
    %192 = vperm.xlu0 %191, %v31
    %v193 = vpop.permute.xlu0 %192
    %vm194 = vcmp.eq.s32.totalorder %v33, %v148
    %vm195 = vcmp.eq.s32.totalorder %v33, %v151
    %vm196 = vcmp.eq.s32.totalorder %v33, %v154
    %vm197 = vcmp.eq.s32.totalorder %v33, %v157
    %vm198 = vcmp.eq.s32.totalorder %v33, %v160
    %vm199 = vcmp.eq.s32.totalorder %v33, %v163
    %vm200 = vcmp.eq.s32.totalorder %v33, %v166
    %vm201 = vcmp.eq.s32.totalorder %v33, %v169
    %vm202 = vcmp.eq.s32.totalorder %v33, %v172
    %vm203 = vcmp.eq.s32.totalorder %v33, %v175
    %vm204 = vcmp.eq.s32.totalorder %v33, %v178
    %vm205 = vcmp.eq.s32.totalorder %v33, %v181
    %vm206 = vcmp.eq.s32.totalorder %v33, %v184
    %vm207 = vcmp.eq.s32.totalorder %v33, %v187
    %vm208 = vcmp.eq.s32.totalorder %v33, %v190
    %vm209 = vcmp.eq.s32.totalorder %v33, %v193
    %v210 = vsel %vm194, 1, 0
    %v211 = vsel %vm195, 1, 0
    %v212 = vsel %vm196, 1, 0
    %v213 = vsel %vm197, 1, 0
    %v214 = vsel %vm198, 1, 0
    %v215 = vsel %vm199, 1, 0
    %v216 = vsel %vm200, 1, 0
    %v217 = vsel %vm201, 1, 0
    %v218 = vsel %vm202, 1, 0
    %v219 = vsel %vm203, 1, 0
    %v220 = vsel %vm204, 1, 0
    %v221 = vsel %vm205, 1, 0
    %v222 = vsel %vm206, 1, 0
    %v223 = vsel %vm207, 1, 0
    %v224 = vsel %vm208, 1, 0
    %v225 = vsel %vm209, 1, 0
    %v226 = vcvt.s32.f32 %v210
    %v227 = vcvt.s32.f32 %v211
    %v228 = vcvt.s32.f32 %v212
    %v229 = vcvt.s32.f32 %v213
    %v230 = vcvt.s32.f32 %v214
    %v231 = vcvt.s32.f32 %v215
    %v232 = vcvt.s32.f32 %v216
    %v233 = vcvt.s32.f32 %v217
    %v234 = vcvt.s32.f32 %v218
    %v235 = vcvt.s32.f32 %v219
    %v236 = vcvt.s32.f32 %v220
    %v237 = vcvt.s32.f32 %v221
    %v238 = vcvt.s32.f32 %v222
    %v239 = vcvt.s32.f32 %v223
    %v240 = vcvt.s32.f32 %v224
    %v241 = vcvt.s32.f32 %v225
    %v242 = vadd.f32 %v130, %v226
    %v243 = vadd.f32 %v131, %v227
    %v244 = vadd.f32 %v132, %v228
    %v245 = vadd.f32 %v133, %v229
    %v246 = vadd.f32 %v134, %v230
    %v247 = vadd.f32 %v135, %v231
    %v248 = vadd.f32 %v136, %v232
    %v249 = vadd.f32 %v137, %v233
    %v250 = vadd.f32 %v138, %v234
    %v251 = vadd.f32 %v139, %v235
    %v252 = vadd.f32 %v140, %v236
    %v253 = vadd.f32 %v141, %v237
    %v254 = vadd.f32 %v142, %v238
    %v255 = vadd.f32 %v143, %v239
    %v256 = vadd.f32 %v144, %v240
    %v257 = vadd.f32 %v145, %v241
    %258 = vset.pattern.permute.xlu0 2
    %259 = vperm.xlu0 %258, %v16
    %v260 = vpop.permute.xlu0 %259
    %261 = vset.pattern.permute.xlu0 2
    %262 = vperm.xlu0 %261, %v17
    %v263 = vpop.permute.xlu0 %262
    %264 = vset.pattern.permute.xlu0 2
    %265 = vperm.xlu0 %264, %v18
    %v266 = vpop.permute.xlu0 %265
    %267 = vset.pattern.permute.xlu0 2
    %268 = vperm.xlu0 %267, %v19
    %v269 = vpop.permute.xlu0 %268
    %270 = vset.pattern.permute.xlu0 2
    %271 = vperm.xlu0 %270, %v20
    %v272 = vpop.permute.xlu0 %271
    %273 = vset.pattern.permute.xlu0 2
    %274 = vperm.xlu0 %273, %v21
    %v275 = vpop.permute.xlu0 %274
    %276 = vset.pattern.permute.xlu0 2
    %277 = vperm.xlu0 %276, %v22
    %v278 = vpop.permute.xlu0 %277
    %279 = vset.pattern.permute.xlu0 2
    %280 = vperm.xlu0 %279, %v23
    %v281 = vpop.permute.xlu0 %280
    %282 = vset.pattern.permute.xlu0 2
    %283 = vperm.xlu0 %282, %v24
    %v284 = vpop.permute.xlu0 %283
    %285 = vset.pattern.permute.xlu0 2
    %286 = vperm.xlu0 %285, %v25
    %v287 = vpop.permute.xlu0 %286
    %288 = vset.pattern.permute.xlu0 2
    %289 = vperm.xlu0 %288, %v26
    %v290 = vpop.permute.xlu0 %289
    %291 = vset.pattern.permute.xlu0 2
    %292 = vperm.xlu0 %291, %v27
    %v293 = vpop.permute.xlu0 %292
    %294 = vset.pattern.permute.xlu0 2
    %295 = vperm.xlu0 %294, %v28
    %v296 = vpop.permute.xlu0 %295
    %297 = vset.pattern.permute.xlu0 2
    %298 = vperm.xlu0 %297, %v29
    %v299 = vpop.permute.xlu0 %298
    %300 = vset.pattern.permute.xlu0 2
    %301 = vperm.xlu0 %300, %v30
    %v302 = vpop.permute.xlu0 %301
    %303 = vset.pattern.permute.xlu0 2
    %304 = vperm.xlu0 %303, %v31
    %v305 = vpop.permute.xlu0 %304
    %vm306 = vcmp.eq.s32.totalorder %v33, %v260
    %vm307 = vcmp.eq.s32.totalorder %v33, %v263
    %vm308 = vcmp.eq.s32.totalorder %v33, %v266
    %vm309 = vcmp.eq.s32.totalorder %v33, %v269
    %vm310 = vcmp.eq.s32.totalorder %v33, %v272
    %vm311 = vcmp.eq.s32.totalorder %v33, %v275
    %vm312 = vcmp.eq.s32.totalorder %v33, %v278
    %vm313 = vcmp.eq.s32.totalorder %v33, %v281
    %vm314 = vcmp.eq.s32.totalorder %v33, %v284
    %vm315 = vcmp.eq.s32.totalorder %v33, %v287
    %vm316 = vcmp.eq.s32.totalorder %v33, %v290
    %vm317 = vcmp.eq.s32.totalorder %v33, %v293
    %vm318 = vcmp.eq.s32.totalorder %v33, %v296
    %vm319 = vcmp.eq.s32.totalorder %v33, %v299
    %vm320 = vcmp.eq.s32.totalorder %v33, %v302
    %vm321 = vcmp.eq.s32.totalorder %v33, %v305
    %v322 = vsel %vm306, 1, 0
    %v323 = vsel %vm307, 1, 0
    %v324 = vsel %vm308, 1, 0
    %v325 = vsel %vm309, 1, 0
    %v326 = vsel %vm310, 1, 0
    %v327 = vsel %vm311, 1, 0
    %v328 = vsel %vm312, 1, 0
    %v329 = vsel %vm313, 1, 0
    %v330 = vsel %vm314, 1, 0
    %v331 = vsel %vm315, 1, 0
    %v332 = vsel %vm316, 1, 0
    %v333 = vsel %vm317, 1, 0
    %v334 = vsel %vm318, 1, 0
    %v335 = vsel %vm319, 1, 0
    %v336 = vsel %vm320, 1, 0
    %v337 = vsel %vm321, 1, 0
    %v338 = vcvt.s32.f32 %v322
    %v339 = vcvt.s32.f32 %v323
    %v340 = vcvt.s32.f32 %v324
    %v341 = vcvt.s32.f32 %v325
    %v342 = vcvt.s32.f32 %v326
    %v343 = vcvt.s32.f32 %v327
    %v344 = vcvt.s32.f32 %v328
    %v345 = vcvt.s32.f32 %v329
    %v346 = vcvt.s32.f32 %v330
    %v347 = vcvt.s32.f32 %v331
    %v348 = vcvt.s32.f32 %v332
    %v349 = vcvt.s32.f32 %v333
    %v350 = vcvt.s32.f32 %v334
    %v351 = vcvt.s32.f32 %v335
    %v352 = vcvt.s32.f32 %v336
    %v353 = vcvt.s32.f32 %v337
    %v354 = vadd.f32 %v242, %v338
    %v355 = vadd.f32 %v243, %v339
    %v356 = vadd.f32 %v244, %v340
    %v357 = vadd.f32 %v245, %v341
    %v358 = vadd.f32 %v246, %v342
    %v359 = vadd.f32 %v247, %v343
    %v360 = vadd.f32 %v248, %v344
    %v361 = vadd.f32 %v249, %v345
    %v362 = vadd.f32 %v250, %v346
    %v363 = vadd.f32 %v251, %v347
    %v364 = vadd.f32 %v252, %v348
    %v365 = vadd.f32 %v253, %v349
    %v366 = vadd.f32 %v254, %v350
    %v367 = vadd.f32 %v255, %v351
    %v368 = vadd.f32 %v256, %v352
    %v369 = vadd.f32 %v257, %v353
    %370 = vset.pattern.permute.xlu0 3
    %371 = vperm.xlu0 %370, %v16
    %v372 = vpop.permute.xlu0 %371
    %373 = vset.pattern.permute.xlu0 3
    %374 = vperm.xlu0 %373, %v17
    %v375 = vpop.permute.xlu0 %374
    %376 = vset.pattern.permute.xlu0 3
    %377 = vperm.xlu0 %376, %v18
    %v378 = vpop.permute.xlu0 %377
    %379 = vset.pattern.permute.xlu0 3
    %380 = vperm.xlu0 %379, %v19
    %v381 = vpop.permute.xlu0 %380
    %382 = vset.pattern.permute.xlu0 3
    %383 = vperm.xlu0 %382, %v20
    %v384 = vpop.permute.xlu0 %383
    %385 = vset.pattern.permute.xlu0 3
    %386 = vperm.xlu0 %385, %v21
    %v387 = vpop.permute.xlu0 %386
    %388 = vset.pattern.permute.xlu0 3
    %389 = vperm.xlu0 %388, %v22
    %v390 = vpop.permute.xlu0 %389
    %391 = vset.pattern.permute.xlu0 3
    %392 = vperm.xlu0 %391, %v23
    %v393 = vpop.permute.xlu0 %392
    %394 = vset.pattern.permute.xlu0 3
    %395 = vperm.xlu0 %394, %v24
    %v396 = vpop.permute.xlu0 %395
    %397 = vset.pattern.permute.xlu0 3
    %398 = vperm.xlu0 %397, %v25
    %v399 = vpop.permute.xlu0 %398
    %400 = vset.pattern.permute.xlu0 3
    %401 = vperm.xlu0 %400, %v26
    %v402 = vpop.permute.xlu0 %401
    %403 = vset.pattern.permute.xlu0 3
    %404 = vperm.xlu0 %403, %v27
    %v405 = vpop.permute.xlu0 %404
    %406 = vset.pattern.permute.xlu0 3
    %407 = vperm.xlu0 %406, %v28
    %v408 = vpop.permute.xlu0 %407
    %409 = vset.pattern.permute.xlu0 3
    %410 = vperm.xlu0 %409, %v29
    %v411 = vpop.permute.xlu0 %410
    %412 = vset.pattern.permute.xlu0 3
    %413 = vperm.xlu0 %412, %v30
    %v414 = vpop.permute.xlu0 %413
    %415 = vset.pattern.permute.xlu0 3
    %416 = vperm.xlu0 %415, %v31
    %v417 = vpop.permute.xlu0 %416
    %vm418 = vcmp.eq.s32.totalorder %v33, %v372
    %vm419 = vcmp.eq.s32.totalorder %v33, %v375
    %vm420 = vcmp.eq.s32.totalorder %v33, %v378
    %vm421 = vcmp.eq.s32.totalorder %v33, %v381
    %vm422 = vcmp.eq.s32.totalorder %v33, %v384
    %vm423 = vcmp.eq.s32.totalorder %v33, %v387
    %vm424 = vcmp.eq.s32.totalorder %v33, %v390
    %vm425 = vcmp.eq.s32.totalorder %v33, %v393
    %vm426 = vcmp.eq.s32.totalorder %v33, %v396
    %vm427 = vcmp.eq.s32.totalorder %v33, %v399
    %vm428 = vcmp.eq.s32.totalorder %v33, %v402
    %vm429 = vcmp.eq.s32.totalorder %v33, %v405
    %vm430 = vcmp.eq.s32.totalorder %v33, %v408
    %vm431 = vcmp.eq.s32.totalorder %v33, %v411
    %vm432 = vcmp.eq.s32.totalorder %v33, %v414
    %vm433 = vcmp.eq.s32.totalorder %v33, %v417
    %v434 = vsel %vm418, 1, 0
    %v435 = vsel %vm419, 1, 0
    %v436 = vsel %vm420, 1, 0
    %v437 = vsel %vm421, 1, 0
    %v438 = vsel %vm422, 1, 0
    %v439 = vsel %vm423, 1, 0
    %v440 = vsel %vm424, 1, 0
    %v441 = vsel %vm425, 1, 0
    %v442 = vsel %vm426, 1, 0
    %v443 = vsel %vm427, 1, 0
    %v444 = vsel %vm428, 1, 0
    %v445 = vsel %vm429, 1, 0
    %v446 = vsel %vm430, 1, 0
    %v447 = vsel %vm431, 1, 0
    %v448 = vsel %vm432, 1, 0
    %v449 = vsel %vm433, 1, 0
    %v450 = vcvt.s32.f32 %v434
    %v451 = vcvt.s32.f32 %v435
    %v452 = vcvt.s32.f32 %v436
    %v453 = vcvt.s32.f32 %v437
    %v454 = vcvt.s32.f32 %v438
    %v455 = vcvt.s32.f32 %v439
    %v456 = vcvt.s32.f32 %v440
    %v457 = vcvt.s32.f32 %v441
    %v458 = vcvt.s32.f32 %v442
    %v459 = vcvt.s32.f32 %v443
    %v460 = vcvt.s32.f32 %v444
    %v461 = vcvt.s32.f32 %v445
    %v462 = vcvt.s32.f32 %v446
    %v463 = vcvt.s32.f32 %v447
    %v464 = vcvt.s32.f32 %v448
    %v465 = vcvt.s32.f32 %v449
    %v466 = vadd.f32 %v354, %v450
    %v467 = vadd.f32 %v355, %v451
    %v468 = vadd.f32 %v356, %v452
    %v469 = vadd.f32 %v357, %v453
    %v470 = vadd.f32 %v358, %v454
    %v471 = vadd.f32 %v359, %v455
    %v472 = vadd.f32 %v360, %v456
    %v473 = vadd.f32 %v361, %v457
    %v474 = vadd.f32 %v362, %v458
    %v475 = vadd.f32 %v363, %v459
    %v476 = vadd.f32 %v364, %v460
    %v477 = vadd.f32 %v365, %v461
    %v478 = vadd.f32 %v366, %v462
    %v479 = vadd.f32 %v367, %v463
    %v480 = vadd.f32 %v368, %v464
    %v481 = vadd.f32 %v369, %v465
    %v482 = vld [vmem:[%s1] sm:$0xff]
    %v483 = vld [vmem:[%s1 + $0x8] sm:$0xff]
    %v484 = vld [vmem:[%s1 + $0x10] sm:$0x3]
    %vm485 = vcmask 146432
    %v487 = vsel %vm485, %v466, 0
    %v490 = vsel %vm485, %v467, 0
    %v493 = vsel %vm485, %v468, 0
    %v496 = vsel %vm485, %v469, 0
    %v499 = vsel %vm485, %v470, 0
    %v502 = vsel %vm485, %v471, 0
    %v505 = vsel %vm485, %v472, 0
    %v508 = vsel %vm485, %v473, 0
    %v511 = vsel %vm485, %v474, 0
    %v514 = vsel %vm485, %v475, 0
    %v517 = vsel %vm485, %v476, 0
    %v520 = vsel %vm485, %v477, 0
    %v523 = vsel %vm485, %v478, 0
    %v526 = vsel %vm485, %v479, 0
    %v529 = vsel %vm485, %v480, 0
    %v532 = vsel %vm485, %v481, 0
    %vm534 = vcmask 1041408
    %v536 = vsel %vm534, %v484, 0
    %538 = vmatpush.msra.mxu0 0.0
    %539 = vmatpush.msra.mxu0 0.0
    %540 = vmatpush.msra.mxu0 0.0
    %541 = vmatpush.msra.mxu0 0.0
    %542 = vmatpush.msra.mxu0 0.0
    %543 = vmatpush.msra.mxu0 0.0
    %544 = vmatpush.msra.mxu0 0.0
    %545 = vmatpush.msra.mxu0 0.0
    %546 = vmatpush.msra.mxu0 0.0
    %547 = vmatpush.msra.mxu0 0.0
    %548 = vmatpush.msra.mxu0 0.0
    %549 = vmatpush.msra.mxu0 0.0
    %550 = vmatpush.msra.mxu0 0.0
    %551 = vmatpush.msra.mxu0 %v536
    %552 = vmatpush.msra.mxu0 %v483
    %553 = vmatpush.msra.mxu0 %v482
    %554 = vmatmul.f32.gmra.mxu0 %v487
    %v555 = vpop.f32.mrf.mxu0
    %v556 = vadd.f32 0.0, %v555
    %557 = vmatmul.f32.gmra.mxu0 %v490
    %v558 = vpop.f32.mrf.mxu0
    %v559 = vadd.f32 0.0, %v558
    %560 = vmatmul.f32.gmra.mxu0 %v493
    %v561 = vpop.f32.mrf.mxu0
    %v562 = vadd.f32 0.0, %v561
    %563 = vmatmul.f32.gmra.mxu0 %v496
    %v564 = vpop.f32.mrf.mxu0
    %v565 = vadd.f32 0.0, %v564
    %566 = vmatmul.f32.gmra.mxu0 %v499
    %v567 = vpop.f32.mrf.mxu0
    %v568 = vadd.f32 0.0, %v567
    %569 = vmatmul.f32.gmra.mxu0 %v502
    %v570 = vpop.f32.mrf.mxu0
    %v571 = vadd.f32 0.0, %v570
    %572 = vmatmul.f32.gmra.mxu0 %v505
    %v573 = vpop.f32.mrf.mxu0
    %v574 = vadd.f32 0.0, %v573
    %575 = vmatmul.f32.gmra.mxu0 %v508
    %v576 = vpop.f32.mrf.mxu0
    %v577 = vadd.f32 0.0, %v576
    %578 = vmatmul.f32.gmra.mxu0 %v511
    %v579 = vpop.f32.mrf.mxu0
    %v580 = vadd.f32 0.0, %v579
    %581 = vmatmul.f32.gmra.mxu0 %v514
    %v582 = vpop.f32.mrf.mxu0
    %v583 = vadd.f32 0.0, %v582
    %584 = vmatmul.f32.gmra.mxu0 %v517
    %v585 = vpop.f32.mrf.mxu0
    %v586 = vadd.f32 0.0, %v585
    %587 = vmatmul.f32.gmra.mxu0 %v520
    %v588 = vpop.f32.mrf.mxu0
    %v589 = vadd.f32 0.0, %v588
    %590 = vmatmul.f32.gmra.mxu0 %v523
    %v591 = vpop.f32.mrf.mxu0
    %v592 = vadd.f32 0.0, %v591
    %593 = vmatmul.f32.gmra.mxu0 %v526
    %v594 = vpop.f32.mrf.mxu0
    %v595 = vadd.f32 0.0, %v594
    %596 = vmatmul.f32.gmra.mxu0 %v529
    %v597 = vpop.f32.mrf.mxu0
    %v598 = vadd.f32 0.0, %v597
    %599 = vmatmul.f32.gmra.mxu0 %v532
    %v600 = vpop.f32.mrf.mxu0
    %v601 = vadd.f32 0.0, %v600
    %602 = vdwg.mxu0
    %v603 = vmul.f32 %v556, %v556
    %v604 = vmul.f32 %v559, %v559
    %v605 = vmul.f32 %v562, %v562
    %v606 = vmul.f32 %v565, %v565
    %v607 = vmul.f32 %v568, %v568
    %v608 = vmul.f32 %v571, %v571
    %v609 = vmul.f32 %v574, %v574
    %v610 = vmul.f32 %v577, %v577
    %v611 = vmul.f32 %v580, %v580
    %v612 = vmul.f32 %v583, %v583
    %v613 = vmul.f32 %v586, %v586
    %v614 = vmul.f32 %v589, %v589
    %v615 = vmul.f32 %v592, %v592
    %v616 = vmul.f32 %v595, %v595
    %v617 = vmul.f32 %v598, %v598
    %v618 = vmul.f32 %v601, %v601
    %635 = vrot.lane.b32.xlu0 %v556, 96
    %v636 = vpop.permute.xlu0 %635
    %637 = vrot.lane.b32.xlu0 %v559, 96
    %v638 = vpop.permute.xlu0 %637
    %639 = vrot.lane.b32.xlu0 %v562, 96
    %v640 = vpop.permute.xlu0 %639
    %641 = vrot.lane.b32.xlu0 %v565, 96
    %v642 = vpop.permute.xlu0 %641
    %643 = vrot.lane.b32.xlu0 %v568, 96
    %v644 = vpop.permute.xlu0 %643
    %645 = vrot.lane.b32.xlu0 %v571, 96
    %v646 = vpop.permute.xlu0 %645
    %647 = vrot.lane.b32.xlu0 %v574, 96
    %v648 = vpop.permute.xlu0 %647
    %649 = vrot.lane.b32.xlu0 %v577, 96
    %v650 = vpop.permute.xlu0 %649
    %651 = vrot.lane.b32.xlu0 %v580, 96
    %v652 = vpop.permute.xlu0 %651
    %653 = vrot.lane.b32.xlu0 %v583, 96
    %v654 = vpop.permute.xlu0 %653
    %655 = vrot.lane.b32.xlu0 %v586, 96
    %v656 = vpop.permute.xlu0 %655
    %657 = vrot.lane.b32.xlu0 %v589, 96
    %v658 = vpop.permute.xlu0 %657
    %659 = vrot.lane.b32.xlu0 %v592, 96
    %v660 = vpop.permute.xlu0 %659
    %661 = vrot.lane.b32.xlu0 %v595, 96
    %v662 = vpop.permute.xlu0 %661
    %663 = vrot.lane.b32.xlu0 %v598, 96
    %v664 = vpop.permute.xlu0 %663
    %665 = vrot.lane.b32.xlu0 %v601, 96
    %v666 = vpop.permute.xlu0 %665
    %v683 = vsub.f32 %v603, %v636
    %v684 = vsub.f32 %v604, %v638
    %v685 = vsub.f32 %v605, %v640
    %v686 = vsub.f32 %v606, %v642
    %v687 = vsub.f32 %v607, %v644
    %v688 = vsub.f32 %v608, %v646
    %v689 = vsub.f32 %v609, %v648
    %v690 = vsub.f32 %v610, %v650
    %v691 = vsub.f32 %v611, %v652
    %v692 = vsub.f32 %v612, %v654
    %v693 = vsub.f32 %v613, %v656
    %v694 = vsub.f32 %v614, %v658
    %v695 = vsub.f32 %v615, %v660
    %v696 = vsub.f32 %v616, %v662
    %v697 = vsub.f32 %v617, %v664
    %v698 = vsub.f32 %v618, %v666
    %vm699 = vcmask 261120
    %v700 = vsel %vm699, %v683, 0.0
    %701 = vadd.xlane.f32.xlu0 %v700
    %v702 = vpop.xlane.xlu0 %701
    %v703 = vsel %vm699, %v684, 0.0
    %704 = vadd.xlane.f32.xlu0 %v703
    %v705 = vpop.xlane.xlu0 %704
    %v706 = vsel %vm699, %v685, 0.0
    %707 = vadd.xlane.f32.xlu0 %v706
    %v708 = vpop.xlane.xlu0 %707
    %v709 = vsel %vm699, %v686, 0.0
    %710 = vadd.xlane.f32.xlu0 %v709
    %v711 = vpop.xlane.xlu0 %710
    %v712 = vsel %vm699, %v687, 0.0
    %713 = vadd.xlane.f32.xlu0 %v712
    %v714 = vpop.xlane.xlu0 %713
    %v715 = vsel %vm699, %v688, 0.0
    %716 = vadd.xlane.f32.xlu0 %v715
    %v717 = vpop.xlane.xlu0 %716
    %v718 = vsel %vm699, %v689, 0.0
    %719 = vadd.xlane.f32.xlu0 %v718
    %v720 = vpop.xlane.xlu0 %719
    %v721 = vsel %vm699, %v690, 0.0
    %722 = vadd.xlane.f32.xlu0 %v721
    %v723 = vpop.xlane.xlu0 %722
    %v724 = vsel %vm699, %v691, 0.0
    %725 = vadd.xlane.f32.xlu0 %v724
    %v726 = vpop.xlane.xlu0 %725
    %v727 = vsel %vm699, %v692, 0.0
    %728 = vadd.xlane.f32.xlu0 %v727
    %v729 = vpop.xlane.xlu0 %728
    %v730 = vsel %vm699, %v693, 0.0
    %731 = vadd.xlane.f32.xlu0 %v730
    %v732 = vpop.xlane.xlu0 %731
    %v733 = vsel %vm699, %v694, 0.0
    %734 = vadd.xlane.f32.xlu0 %v733
    %v735 = vpop.xlane.xlu0 %734
    %v736 = vsel %vm699, %v695, 0.0
    %737 = vadd.xlane.f32.xlu0 %v736
    %v738 = vpop.xlane.xlu0 %737
    %v739 = vsel %vm699, %v696, 0.0
    %740 = vadd.xlane.f32.xlu0 %v739
    %v741 = vpop.xlane.xlu0 %740
    %v742 = vsel %vm699, %v697, 0.0
    %743 = vadd.xlane.f32.xlu0 %v742
    %v744 = vpop.xlane.xlu0 %743
    %v745 = vsel %vm699, %v698, 0.0
    %746 = vadd.xlane.f32.xlu0 %v745
    %v747 = vpop.xlane.xlu0 %746
    %v748 = vmul.f32 %v702, 0.5
    %v749 = vmul.f32 %v705, 0.5
    %v750 = vmul.f32 %v708, 0.5
    %v751 = vmul.f32 %v711, 0.5
    %v752 = vmul.f32 %v714, 0.5
    %v753 = vmul.f32 %v717, 0.5
    %v754 = vmul.f32 %v720, 0.5
    %v755 = vmul.f32 %v723, 0.5
    %v756 = vmul.f32 %v726, 0.5
    %v757 = vmul.f32 %v729, 0.5
    %v758 = vmul.f32 %v732, 0.5
    %v759 = vmul.f32 %v735, 0.5
    %v760 = vmul.f32 %v738, 0.5
    %v761 = vmul.f32 %v741, 0.5
    %v762 = vmul.f32 %v744, 0.5
    %v763 = vmul.f32 %v747, 0.5
    %s764 = sld [smem:[#allocation2]]
    %v765 = vstv %s764
    %v766 = vadd.f32 %v556, %v765
    %v767 = vadd.f32 %v559, %v765
    %v768 = vadd.f32 %v562, %v765
    %v769 = vadd.f32 %v565, %v765
    %v770 = vadd.f32 %v568, %v765
    %v771 = vadd.f32 %v571, %v765
    %v772 = vadd.f32 %v574, %v765
    %v773 = vadd.f32 %v577, %v765
    %v774 = vadd.f32 %v580, %v765
    %v775 = vadd.f32 %v583, %v765
    %v776 = vadd.f32 %v586, %v765
    %v777 = vadd.f32 %v589, %v765
    %v778 = vadd.f32 %v592, %v765
    %v779 = vadd.f32 %v595, %v765
    %v780 = vadd.f32 %v598, %v765
    %v781 = vadd.f32 %v601, %v765
    %v782 = vadd.f32 %v766, %v748
    %v783 = vadd.f32 %v767, %v749
    %v784 = vadd.f32 %v768, %v750
    %v785 = vadd.f32 %v769, %v751
    %v786 = vadd.f32 %v770, %v752
    %v787 = vadd.f32 %v771, %v753
    %v788 = vadd.f32 %v772, %v754
    %v789 = vadd.f32 %v773, %v755
    %v790 = vadd.f32 %v774, %v756
    %v791 = vadd.f32 %v775, %v757
    %v792 = vadd.f32 %v776, %v758
    %v793 = vadd.f32 %v777, %v759
    %v794 = vadd.f32 %v778, %v760
    %v795 = vadd.f32 %v779, %v761
    %v796 = vadd.f32 %v780, %v762
    %v797 = vadd.f32 %v781, %v763
    %v798 = vxor.u32 %v782, 2147483648
    %v799 = vxor.u32 %v783, 2147483648
    %v800 = vxor.u32 %v784, 2147483648
    %v801 = vxor.u32 %v785, 2147483648
    %v802 = vxor.u32 %v786, 2147483648
    %v803 = vxor.u32 %v787, 2147483648
    %v804 = vxor.u32 %v788, 2147483648
    %v805 = vxor.u32 %v789, 2147483648
    %v806 = vxor.u32 %v790, 2147483648
    %v807 = vxor.u32 %v791, 2147483648
    %v808 = vxor.u32 %v792, 2147483648
    %v809 = vxor.u32 %v793, 2147483648
    %v810 = vxor.u32 %v794, 2147483648
    %v811 = vxor.u32 %v795, 2147483648
    %v812 = vxor.u32 %v796, 2147483648
    %v813 = vxor.u32 %v797, 2147483648
    %v814 = vmul.f32 %v798, 1.442695
    %v815 = vpow.pop %v814
    %v816 = vmul.f32 %v799, 1.442695
    %v817 = vpow.pop %v816
    %v818 = vmul.f32 %v800, 1.442695
    %v819 = vpow.pop %v818
    %v820 = vmul.f32 %v801, 1.442695
    %v821 = vpow.pop %v820
    %v822 = vmul.f32 %v802, 1.442695
    %v823 = vpow.pop %v822
    %v824 = vmul.f32 %v803, 1.442695
    %v825 = vpow.pop %v824
    %v826 = vmul.f32 %v804, 1.442695
    %v827 = vpow.pop %v826
    %v828 = vmul.f32 %v805, 1.442695
    %v829 = vpow.pop %v828
    %v830 = vmul.f32 %v806, 1.442695
    %v831 = vpow.pop %v830
    %v832 = vmul.f32 %v807, 1.442695
    %v833 = vpow.pop %v832
    %v834 = vmul.f32 %v808, 1.442695
    %v835 = vpow.pop %v834
    %v836 = vmul.f32 %v809, 1.442695
    %v837 = vpow.pop %v836
    %v838 = vmul.f32 %v810, 1.442695
    %v839 = vpow.pop %v838
    %v840 = vmul.f32 %v811, 1.442695
    %v841 = vpow.pop %v840
    %v842 = vmul.f32 %v812, 1.442695
    %v843 = vpow.pop %v842
    %v844 = vmul.f32 %v813, 1.442695
    %v845 = vpow.pop %v844
    %v846 = vadd.f32 %v815, 1.0
    %v847 = vadd.f32 %v817, 1.0
    %v848 = vadd.f32 %v819, 1.0
    %v849 = vadd.f32 %v821, 1.0
    %v850 = vadd.f32 %v823, 1.0
    %v851 = vadd.f32 %v825, 1.0
    %v852 = vadd.f32 %v827, 1.0
    %v853 = vadd.f32 %v829, 1.0
    %v854 = vadd.f32 %v831, 1.0
    %v855 = vadd.f32 %v833, 1.0
    %v856 = vadd.f32 %v835, 1.0
    %v857 = vadd.f32 %v837, 1.0
    %v858 = vadd.f32 %v839, 1.0
    %v859 = vadd.f32 %v841, 1.0
    %v860 = vadd.f32 %v843, 1.0
    %v861 = vadd.f32 %v845, 1.0
    %v862 = vrcp.pop %v846
    %v863 = vmul.f32 %v846, %v862
    %v864 = vsub.f32 1.0, %v863
    %v865 = vmul.f32 %v862, %v864
    %v866 = vadd.f32 %v862, %v865
    %vm867 = vweird.f32 %v846
    %vm868 = vweird.f32 %v862
    %vm869 = vmor %vm867, %vm868
    %v870 = vsel %vm869, %v862, %v866
    %v871 = vand.u32 2147483647, %v846
    %vm872 = vcmp.eq.f32.partialorder %v871, 8.507059e+37
    %v873 = vand.u32 %v846, 2147483648
    %v874 = vor.u32 1.1754944e-38, %v873
    %v875 = vsel %vm872, %v874, %v870
    %v876 = vmul.f32 1.0, %v875
    %v877 = vrcp.pop %v847
    %v878 = vmul.f32 %v847, %v877
    %v879 = vsub.f32 1.0, %v878
    %v880 = vmul.f32 %v877, %v879
    %v881 = vadd.f32 %v877, %v880
    %vm882 = vweird.f32 %v847
    %vm883 = vweird.f32 %v877
    %vm884 = vmor %vm882, %vm883
    %v885 = vsel %vm884, %v877, %v881
    %v886 = vand.u32 2147483647, %v847
    %vm887 = vcmp.eq.f32.partialorder %v886, 8.507059e+37
    %v888 = vand.u32 %v847, 2147483648
    %v889 = vor.u32 1.1754944e-38, %v888
    %v890 = vsel %vm887, %v889, %v885
    %v891 = vmul.f32 1.0, %v890
    %v892 = vrcp.pop %v848
    %v893 = vmul.f32 %v848, %v892
    %v894 = vsub.f32 1.0, %v893
    %v895 = vmul.f32 %v892, %v894
    %v896 = vadd.f32 %v892, %v895
    %vm897 = vweird.f32 %v848
    %vm898 = vweird.f32 %v892
    %vm899 = vmor %vm897, %vm898
    %v900 = vsel %vm899, %v892, %v896
    %v901 = vand.u32 2147483647, %v848
    %vm902 = vcmp.eq.f32.partialorder %v901, 8.507059e+37
    %v903 = vand.u32 %v848, 2147483648
    %v904 = vor.u32 1.1754944e-38, %v903
    %v905 = vsel %vm902, %v904, %v900
    %v906 = vmul.f32 1.0, %v905
    %v907 = vrcp.pop %v849
    %v908 = vmul.f32 %v849, %v907
    %v909 = vsub.f32 1.0, %v908
    %v910 = vmul.f32 %v907, %v909
    %v911 = vadd.f32 %v907, %v910
    %vm912 = vweird.f32 %v849
    %vm913 = vweird.f32 %v907
    %vm914 = vmor %vm912, %vm913
    %v915 = vsel %vm914, %v907, %v911
    %v916 = vand.u32 2147483647, %v849
    %vm917 = vcmp.eq.f32.partialorder %v916, 8.507059e+37
    %v918 = vand.u32 %v849, 2147483648
    %v919 = vor.u32 1.1754944e-38, %v918
    %v920 = vsel %vm917, %v919, %v915
    %v921 = vmul.f32 1.0, %v920
    %v922 = vrcp.pop %v850
    %v923 = vmul.f32 %v850, %v922
    %v924 = vsub.f32 1.0, %v923
    %v925 = vmul.f32 %v922, %v924
    %v926 = vadd.f32 %v922, %v925
    %vm927 = vweird.f32 %v850
    %vm928 = vweird.f32 %v922
    %vm929 = vmor %vm927, %vm928
    %v930 = vsel %vm929, %v922, %v926
    %v931 = vand.u32 2147483647, %v850
    %vm932 = vcmp.eq.f32.partialorder %v931, 8.507059e+37
    %v933 = vand.u32 %v850, 2147483648
    %v934 = vor.u32 1.1754944e-38, %v933
    %v935 = vsel %vm932, %v934, %v930
    %v936 = vmul.f32 1.0, %v935
    %v937 = vrcp.pop %v851
    %v938 = vmul.f32 %v851, %v937
    %v939 = vsub.f32 1.0, %v938
    %v940 = vmul.f32 %v937, %v939
    %v941 = vadd.f32 %v937, %v940
    %vm942 = vweird.f32 %v851
    %vm943 = vweird.f32 %v937
    %vm944 = vmor %vm942, %vm943
    %v945 = vsel %vm944, %v937, %v941
    %v946 = vand.u32 2147483647, %v851
    %vm947 = vcmp.eq.f32.partialorder %v946, 8.507059e+37
    %v948 = vand.u32 %v851, 2147483648
    %v949 = vor.u32 1.1754944e-38, %v948
    %v950 = vsel %vm947, %v949, %v945
    %v951 = vmul.f32 1.0, %v950
    %v952 = vrcp.pop %v852
    %v953 = vmul.f32 %v852, %v952
    %v954 = vsub.f32 1.0, %v953
    %v955 = vmul.f32 %v952, %v954
    %v956 = vadd.f32 %v952, %v955
    %vm957 = vweird.f32 %v852
    %vm958 = vweird.f32 %v952
    %vm959 = vmor %vm957, %vm958
    %v960 = vsel %vm959, %v952, %v956
    %v961 = vand.u32 2147483647, %v852
    %vm962 = vcmp.eq.f32.partialorder %v961, 8.507059e+37
    %v963 = vand.u32 %v852, 2147483648
    %v964 = vor.u32 1.1754944e-38, %v963
    %v965 = vsel %vm962, %v964, %v960
    %v966 = vmul.f32 1.0, %v965
    %v967 = vrcp.pop %v853
    %v968 = vmul.f32 %v853, %v967
    %v969 = vsub.f32 1.0, %v968
    %v970 = vmul.f32 %v967, %v969
    %v971 = vadd.f32 %v967, %v970
    %vm972 = vweird.f32 %v853
    %vm973 = vweird.f32 %v967
    %vm974 = vmor %vm972, %vm973
    %v975 = vsel %vm974, %v967, %v971
    %v976 = vand.u32 2147483647, %v853
    %vm977 = vcmp.eq.f32.partialorder %v976, 8.507059e+37
    %v978 = vand.u32 %v853, 2147483648
    %v979 = vor.u32 1.1754944e-38, %v978
    %v980 = vsel %vm977, %v979, %v975
    %v981 = vmul.f32 1.0, %v980
    %v982 = vrcp.pop %v854
    %v983 = vmul.f32 %v854, %v982
    %v984 = vsub.f32 1.0, %v983
    %v985 = vmul.f32 %v982, %v984
    %v986 = vadd.f32 %v982, %v985
    %vm987 = vweird.f32 %v854
    %vm988 = vweird.f32 %v982
    %vm989 = vmor %vm987, %vm988
    %v990 = vsel %vm989, %v982, %v986
    %v991 = vand.u32 2147483647, %v854
    %vm992 = vcmp.eq.f32.partialorder %v991, 8.507059e+37
    %v993 = vand.u32 %v854, 2147483648
    %v994 = vor.u32 1.1754944e-38, %v993
    %v995 = vsel %vm992, %v994, %v990
    %v996 = vmul.f32 1.0, %v995
    %v997 = vrcp.pop %v855
    %v998 = vmul.f32 %v855, %v997
    %v999 = vsub.f32 1.0, %v998
    %v1000 = vmul.f32 %v997, %v999
    %v1001 = vadd.f32 %v997, %v1000
    %vm1002 = vweird.f32 %v855
    %vm1003 = vweird.f32 %v997
    %vm1004 = vmor %vm1002, %vm1003
    %v1005 = vsel %vm1004, %v997, %v1001
    %v1006 = vand.u32 2147483647, %v855
    %vm1007 = vcmp.eq.f32.partialorder %v1006, 8.507059e+37
    %v1008 = vand.u32 %v855, 2147483648
    %v1009 = vor.u32 1.1754944e-38, %v1008
    %v1010 = vsel %vm1007, %v1009, %v1005
    %v1011 = vmul.f32 1.0, %v1010
    %v1012 = vrcp.pop %v856
    %v1013 = vmul.f32 %v856, %v1012
    %v1014 = vsub.f32 1.0, %v1013
    %v1015 = vmul.f32 %v1012, %v1014
    %v1016 = vadd.f32 %v1012, %v1015
    %vm1017 = vweird.f32 %v856
    %vm1018 = vweird.f32 %v1012
    %vm1019 = vmor %vm1017, %vm1018
    %v1020 = vsel %vm1019, %v1012, %v1016
    %v1021 = vand.u32 2147483647, %v856
    %vm1022 = vcmp.eq.f32.partialorder %v1021, 8.507059e+37
    %v1023 = vand.u32 %v856, 2147483648
    %v1024 = vor.u32 1.1754944e-38, %v1023
    %v1025 = vsel %vm1022, %v1024, %v1020
    %v1026 = vmul.f32 1.0, %v1025
    %v1027 = vrcp.pop %v857
    %v1028 = vmul.f32 %v857, %v1027
    %v1029 = vsub.f32 1.0, %v1028
    %v1030 = vmul.f32 %v1027, %v1029
    %v1031 = vadd.f32 %v1027, %v1030
    %vm1032 = vweird.f32 %v857
    %vm1033 = vweird.f32 %v1027
    %vm1034 = vmor %vm1032, %vm1033
    %v1035 = vsel %vm1034, %v1027, %v1031
    %v1036 = vand.u32 2147483647, %v857
    %vm1037 = vcmp.eq.f32.partialorder %v1036, 8.507059e+37
    %v1038 = vand.u32 %v857, 2147483648
    %v1039 = vor.u32 1.1754944e-38, %v1038
    %v1040 = vsel %vm1037, %v1039, %v1035
    %v1041 = vmul.f32 1.0, %v1040
    %v1042 = vrcp.pop %v858
    %v1043 = vmul.f32 %v858, %v1042
    %v1044 = vsub.f32 1.0, %v1043
    %v1045 = vmul.f32 %v1042, %v1044
    %v1046 = vadd.f32 %v1042, %v1045
    %vm1047 = vweird.f32 %v858
    %vm1048 = vweird.f32 %v1042
    %vm1049 = vmor %vm1047, %vm1048
    %v1050 = vsel %vm1049, %v1042, %v1046
    %v1051 = vand.u32 2147483647, %v858
    %vm1052 = vcmp.eq.f32.partialorder %v1051, 8.507059e+37
    %v1053 = vand.u32 %v858, 2147483648
    %v1054 = vor.u32 1.1754944e-38, %v1053
    %v1055 = vsel %vm1052, %v1054, %v1050
    %v1056 = vmul.f32 1.0, %v1055
    %v1057 = vrcp.pop %v859
    %v1058 = vmul.f32 %v859, %v1057
    %v1059 = vsub.f32 1.0, %v1058
    %v1060 = vmul.f32 %v1057, %v1059
    %v1061 = vadd.f32 %v1057, %v1060
    %vm1062 = vweird.f32 %v859
    %vm1063 = vweird.f32 %v1057
    %vm1064 = vmor %vm1062, %vm1063
    %v1065 = vsel %vm1064, %v1057, %v1061
    %v1066 = vand.u32 2147483647, %v859
    %vm1067 = vcmp.eq.f32.partialorder %v1066, 8.507059e+37
    %v1068 = vand.u32 %v859, 2147483648
    %v1069 = vor.u32 1.1754944e-38, %v1068
    %v1070 = vsel %vm1067, %v1069, %v1065
    %v1071 = vmul.f32 1.0, %v1070
    %v1072 = vrcp.pop %v860
    %v1073 = vmul.f32 %v860, %v1072
    %v1074 = vsub.f32 1.0, %v1073
    %v1075 = vmul.f32 %v1072, %v1074
    %v1076 = vadd.f32 %v1072, %v1075
    %vm1077 = vweird.f32 %v860
    %vm1078 = vweird.f32 %v1072
    %vm1079 = vmor %vm1077, %vm1078
    %v1080 = vsel %vm1079, %v1072, %v1076
    %v1081 = vand.u32 2147483647, %v860
    %vm1082 = vcmp.eq.f32.partialorder %v1081, 8.507059e+37
    %v1083 = vand.u32 %v860, 2147483648
    %v1084 = vor.u32 1.1754944e-38, %v1083
    %v1085 = vsel %vm1082, %v1084, %v1080
    %v1086 = vmul.f32 1.0, %v1085
    %v1087 = vrcp.pop %v861
    %v1088 = vmul.f32 %v861, %v1087
    %v1089 = vsub.f32 1.0, %v1088
    %v1090 = vmul.f32 %v1087, %v1089
    %v1091 = vadd.f32 %v1087, %v1090
    %vm1092 = vweird.f32 %v861
    %vm1093 = vweird.f32 %v1087
    %vm1094 = vmor %vm1092, %vm1093
    %v1095 = vsel %vm1094, %v1087, %v1091
    %v1096 = vand.u32 2147483647, %v861
    %vm1097 = vcmp.eq.f32.partialorder %v1096, 8.507059e+37
    %v1098 = vand.u32 %v861, 2147483648
    %v1099 = vor.u32 1.1754944e-38, %v1098
    %v1100 = vsel %vm1097, %v1099, %v1095
    %v1101 = vmul.f32 1.0, %v1100
    %1118 = vset.pattern.permute.xlu0 64
    %1119 = vperm.xlu0 %1118, %v876
    %v1120 = vpop.permute.xlu0 %1119
    %1121 = vset.pattern.permute.xlu0 64
    %1122 = vperm.xlu0 %1121, %v891
    %v1123 = vpop.permute.xlu0 %1122
    %1124 = vset.pattern.permute.xlu0 64
    %1125 = vperm.xlu0 %1124, %v906
    %v1126 = vpop.permute.xlu0 %1125
    %1127 = vset.pattern.permute.xlu0 64
    %1128 = vperm.xlu0 %1127, %v921
    %v1129 = vpop.permute.xlu0 %1128
    %1130 = vset.pattern.permute.xlu0 64
    %1131 = vperm.xlu0 %1130, %v936
    %v1132 = vpop.permute.xlu0 %1131
    %1133 = vset.pattern.permute.xlu0 64
    %1134 = vperm.xlu0 %1133, %v951
    %v1135 = vpop.permute.xlu0 %1134
    %1136 = vset.pattern.permute.xlu0 64
    %1137 = vperm.xlu0 %1136, %v966
    %v1138 = vpop.permute.xlu0 %1137
    %1139 = vset.pattern.permute.xlu0 64
    %1140 = vperm.xlu0 %1139, %v981
    %v1141 = vpop.permute.xlu0 %1140
    %1142 = vset.pattern.permute.xlu0 64
    %1143 = vperm.xlu0 %1142, %v996
    %v1144 = vpop.permute.xlu0 %1143
    %1145 = vset.pattern.permute.xlu0 64
    %1146 = vperm.xlu0 %1145, %v1011
    %v1147 = vpop.permute.xlu0 %1146
    %1148 = vset.pattern.permute.xlu0 64
    %1149 = vperm.xlu0 %1148, %v1026
    %v1150 = vpop.permute.xlu0 %1149
    %1151 = vset.pattern.permute.xlu0 64
    %1152 = vperm.xlu0 %1151, %v1041
    %v1153 = vpop.permute.xlu0 %1152
    %1154 = vset.pattern.permute.xlu0 64
    %1155 = vperm.xlu0 %1154, %v1056
    %v1156 = vpop.permute.xlu0 %1155
    %1157 = vset.pattern.permute.xlu0 64
    %1158 = vperm.xlu0 %1157, %v1071
    %v1159 = vpop.permute.xlu0 %1158
    %1160 = vset.pattern.permute.xlu0 64
    %1161 = vperm.xlu0 %1160, %v1086
    %v1162 = vpop.permute.xlu0 %1161
    %1163 = vset.pattern.permute.xlu0 64
    %1164 = vperm.xlu0 %1163, %v1101
    %v1165 = vpop.permute.xlu0 %1164
    %v1166 = vperm.slane %v1120, %v33
    %v1167 = vadd.s32 %v33, 4294967288
    %v1168 = vperm.slane %v1123, %v1167
    %vm1169 = vcmask 130112
    %v1170 = vsel %vm1169, %v1168, %v1166
    %v1171 = vadd.s32 %v33, 4294967280
    %v1172 = vperm.slane %v1126, %v1171
    %vm1173 = vcmask 195712
    %v1174 = vsel %vm1173, %v1172, %v1170
    %v1175 = vadd.s32 %v33, 4294967272
    %v1176 = vperm.slane %v1129, %v1175
    %vm1177 = vcmask 261312
    %v1178 = vsel %vm1177, %v1176, %v1174
    %v1179 = vadd.s32 %v33, 4294967264
    %v1180 = vperm.slane %v1132, %v1179
    %vm1181 = vcmask 326912
    %v1182 = vsel %vm1181, %v1180, %v1178
    %v1183 = vadd.s32 %v33, 4294967256
    %v1184 = vperm.slane %v1135, %v1183
    %vm1185 = vcmask 392512
    %v1186 = vsel %vm1185, %v1184, %v1182
    %v1187 = vadd.s32 %v33, 4294967248
    %v1188 = vperm.slane %v1138, %v1187
    %vm1189 = vcmask 458112
    %v1190 = vsel %vm1189, %v1188, %v1186
    %v1191 = vadd.s32 %v33, 4294967240
    %v1192 = vperm.slane %v1141, %v1191
    %vm1193 = vcmask 523712
    %v1194 = vsel %vm1193, %v1192, %v1190
    %v1195 = vadd.s32 %v33, 4294967232
    %v1196 = vperm.slane %v1144, %v1195
    %vm1197 = vcmask 589312
    %v1198 = vsel %vm1197, %v1196, %v1194
    %v1199 = vadd.s32 %v33, 4294967224
    %v1200 = vperm.slane %v1147, %v1199
    %vm1201 = vcmask 654912
    %v1202 = vsel %vm1201, %v1200, %v1198
    %v1203 = vadd.s32 %v33, 4294967216
    %v1204 = vperm.slane %v1150, %v1203
    %vm1205 = vcmask 720512
    %v1206 = vsel %vm1205, %v1204, %v1202
    %v1207 = vadd.s32 %v33, 4294967208
    %v1208 = vperm.slane %v1153, %v1207
    %vm1209 = vcmask 786112
    %v1210 = vsel %vm1209, %v1208, %v1206
    %v1211 = vadd.s32 %v33, 4294967200
    %v1212 = vperm.slane %v1156, %v1211
    %vm1213 = vcmask 851712
    %v1214 = vsel %vm1213, %v1212, %v1210
    %v1215 = vadd.s32 %v33, 4294967192
    %v1216 = vperm.slane %v1159, %v1215
    %vm1217 = vcmask 917312
    %v1218 = vsel %vm1217, %v1216, %v1214
    %v1219 = vadd.s32 %v33, 4294967184
    %v1220 = vperm.slane %v1162, %v1219
    %vm1221 = vcmask 982912
    %v1222 = vsel %vm1221, %v1220, %v1218
    %v1223 = vadd.s32 %v33, 4294967176
    %v1224 = vperm.slane %v1165, %v1223
    %vm1225 = vcmask 1048512
    %v1226 = vsel %vm1225, %v1224, %v1222
    %1228 = vst [vmem:[#allocation3] sm:$0x1] %v1226
    // Predicated region
    $region14: #{tpu_custom_call.1} parent=1 // pred_check
      _
    $region15: #{tpu_custom_call.1} parent=1 // pred_check_branch
      %1230 = sbr.rel (0) target = $region17
    $region16: #{tpu_custom_call.1} parent=1 // pred_region
      %1232 = vsyncadd [#allocation4], 0
      %s1234 = sshll.u32 [#allocation3], 4
      %s1235 = int_to_ptr.vmem [resolvable:$true] %s1234
      %s1236 = sshll.u32 %s3, 4
      %s1237 = int_to_ptr.hbm [resolvable:$true] %s1236
      %1239 = dma.vmem_to_hbm [thread:$0]  %s1235, 16, %s1237, [#allocation4]
    $region17: #{tpu_custom_call.1} parent=1 // pred_fallthru
      _
    // Predicated region
    $region18: #{tpu_custom_call.1} parent=1 // pred_check
      _
    $region19: #{tpu_custom_call.1} parent=1 // pred_check_branch
      %1241 = sbr.rel (0) target = $region21
    $region20: #{tpu_custom_call.1} parent=1 // pred_region
      %1243 = dma.done [#allocation4], 16
    $region21: #{tpu_custom_call.1} parent=1 // pred_fallthru
      _
    %1244 = vsyncpa [#allocation4], 1

</llo_original>
